<compile_context>
chip_gen: v7x
topology: tpu7x:2x2x1
jax: 0.10.0
libtpu: 0.0.40
codegen_flags: <defaults>
</compile_context>

<pallas_src>
import jax
import jax.numpy as jnp
from jax import lax
from jax.experimental import pallas as pl
from jax.experimental.pallas import tpu as pltpu

LANE = 128     # lane width (last-dim tile)
SUBLANE = 8    # f32 sublane count (second-last-dim tile)


def _round_up(n, m):
    return ((n + m - 1) // m) * m


def mlp_kernel(x_ref, w1_ref, w2t_ref, b2_ref, o_ref):
    # x_ref:   (B_pad, IN+1)  -- trailing ones column activates folded b1
    # w1_ref:  (IN+1, HID)    -- b1 folded in as last row
    # w2t_ref: (OUT_pad, HID) -- W2 transposed, zero-padded to 128 output lanes
    # b2_ref:  (1, OUT_pad)   -- zero-padded
    # o_ref:   (B_pad, OUT_pad)
    h = jnp.dot(x_ref[...], w1_ref[...], preferred_element_type=jnp.float32)
    h = jnp.maximum(h, 0.0)                                   # nn.ReLU()
    # out = h @ W2 expressed as a contraction against lane-dense W2^T,
    # keeping the f32 accumulator (no downcast of h).
    y = lax.dot_general(h, w2t_ref[...],
                        dimension_numbers=(((1,), (1,)), ((), ())),
                        preferred_element_type=jnp.float32)
    y = y + b2_ref[...]                                       # (B, O) + (1, O)
    o_ref[...] = y.astype(o_ref.dtype)


def prepare_params(w1, b1, w2, b2):
    """One-time layout plumbing: fold b1 into W1, transpose + lane-pad W2/b2."""
    hid_f, out_f = w2.shape
    w1_aug = jnp.concatenate([w1, b1], axis=0)                 # (IN+1, HID)
    out_pad = _round_up(out_f, LANE)
    w2t = jnp.zeros((out_pad, hid_f), w2.dtype).at[:out_f, :].set(w2.T)
    b2p = jnp.zeros((1, out_pad), b2.dtype).at[:, :out_f].set(b2[0])
    return w1_aug, w2t, b2p


def my_sequential_forward(x, w1, b1, w2, b2):
    B, IN = x.shape
    OUT = w2.shape[1]
    w1_aug, w2t, b2p = prepare_params(w1, b1, w2, b2)

    b_pad = _round_up(max(B, SUBLANE), SUBLANE)
    out_pad = w2t.shape[0]

    # Pad batch to a sublane multiple and append the ones column (bias fold).
    xp = jnp.zeros((b_pad, IN + 1), x.dtype)
    xp = xp.at[:B, :IN].set(x)
    xp = xp.at[:, IN].set(1.0)

    full = lambda a: pl.BlockSpec(a.shape, lambda: (0,) * a.ndim,
                                  memory_space=pltpu.VMEM)
    out = pl.pallas_call(
        mlp_kernel,
        out_shape=jax.ShapeDtypeStruct((b_pad, out_pad), x.dtype),
        in_specs=[full(xp), full(w1_aug), full(w2t), full(b2p)],
        out_specs=pl.BlockSpec((b_pad, out_pad), lambda: (0, 0),
                               memory_space=pltpu.VMEM),
    )(xp, w1_aug, w2t, b2p)
    # Slice padded batch / padded output lanes back to the logical shape.
    return out[:B, :OUT]


def init_params(key, in_f, hid_f, out_f, dtype=jnp.float32):
    # Deterministic init mimicking nn.Linear's U(-1/sqrt(fan_in), 1/sqrt(fan_in)).
    k1, k2, k3, k4 = jax.random.split(key, 4)
    bnd1 = 1.0 / jnp.sqrt(in_f)
    bnd2 = 1.0 / jnp.sqrt(hid_f)
    w1 = jax.random.uniform(k1, (in_f, hid_f), dtype, -bnd1, bnd1)
    b1 = jax.random.uniform(k2, (1, hid_f), dtype, -bnd1, bnd1)
    w2 = jax.random.uniform(k3, (hid_f, out_f), dtype, -bnd2, bnd2)
    b2 = jax.random.uniform(k4, (1, out_f), dtype, -bnd2, bnd2)
    return w1, b1, w2, b2


if __name__ == "__main__":
    key = jax.random.PRNGKey(0)
    kx, kp = jax.random.split(key)

    B, IN, HID, OUT = 2, 20, 256, 10
    x = jax.random.uniform(kx, (B, IN), jnp.float32)           # torch.rand(2, 20)
    w1, b1, w2, b2 = init_params(kp, IN, HID, OUT)

    forward = jax.jit(my_sequential_forward)
    out = jax.block_until_ready(forward(x, w1, b1, w2, b2))

    # Reference check in plain JAX (original un-folded / un-padded math).
    ref = jnp.maximum(x @ w1 + b1, 0.0) @ w2 + b2
    assert out.shape == (B, OUT)
    assert jnp.allclose(out, ref, atol=1e-5, rtol=1e-5)

    print("KERNEL_OK")
</pallas_src>

<mosaic_0001>
module attributes {stable_mosaic.version = 11 : i64} {
  func.func @mlp_kernel(%arg0: memref<8x21xf32, #tpu.memory_space<vmem>>, %arg1: memref<21x256xf32, #tpu.memory_space<vmem>>, %arg2: memref<128x256xf32, #tpu.memory_space<vmem>>, %arg3: memref<1x128xf32, #tpu.memory_space<vmem>>, %arg4: memref<8x128xf32, #tpu.memory_space<vmem>>) attributes {dimension_semantics = [], scalar_prefetch = 0 : i64, scratch_operands = 0 : i64, tpu.core_type = #tpu.core_type<tc>} {
    %c0 = arith.constant 0 : index
    %c0_0 = arith.constant 0 : index
    %0 = vector.load %arg0[%c0, %c0_0] : memref<8x21xf32, #tpu.memory_space<vmem>>, vector<8x21xf32>
    %c0_1 = arith.constant 0 : index
    %c0_2 = arith.constant 0 : index
    %1 = vector.load %arg1[%c0_1, %c0_2] : memref<21x256xf32, #tpu.memory_space<vmem>>, vector<21x256xf32>
    %cst = arith.constant dense<0.000000e+00> : vector<8x256xf32>
    %2 = tpu.matmul %0, %1, %cst {dimension_numbers = #tpu.dot_dimension_numbers<[1], [0], [0], [1], [0, 0, 1, 1], [], []>} : vector<8x21xf32>, vector<21x256xf32>, vector<8x256xf32> -> vector<8x256xf32>
    %cst_3 = arith.constant 0.000000e+00 : f32
    %3 = vector.broadcast %cst_3 : f32 to vector<8x256xf32>
    %4 = arith.maximumf %2, %3 : vector<8x256xf32>
    %c0_4 = arith.constant 0 : index
    %c0_5 = arith.constant 0 : index
    %5 = vector.load %arg2[%c0_4, %c0_5] : memref<128x256xf32, #tpu.memory_space<vmem>>, vector<128x256xf32>
    %cst_6 = arith.constant dense<0.000000e+00> : vector<8x128xf32>
    %6 = tpu.matmul %4, %5, %cst_6 {dimension_numbers = #tpu.dot_dimension_numbers<[1], [1], [0], [0], [0, 0, 1, 0], [], []>} : vector<8x256xf32>, vector<128x256xf32>, vector<8x128xf32> -> vector<8x128xf32>
    %c0_7 = arith.constant 0 : index
    %c0_8 = arith.constant 0 : index
    %7 = vector.load %arg3[%c0_7, %c0_8] : memref<1x128xf32, #tpu.memory_space<vmem>>, vector<1x128xf32>
    %8 = vector.broadcast %7 : vector<1x128xf32> to vector<8x128xf32>
    %9 = arith.addf %6, %8 : vector<8x128xf32>
    %c0_9 = arith.constant 0 : index
    %c0_10 = arith.constant 0 : index
    %10 = vector.load %arg4[%c0_9, %c0_10] : memref<8x128xf32, #tpu.memory_space<vmem>>, vector<8x128xf32>
    tpu.vector_store %arg4[%c0_9, %c0_10], %9 {strides = array<i32>} : memref<8x128xf32, #tpu.memory_space<vmem>>, vector<8x128xf32>,
    return
  }
}

</mosaic_0001>

<llo_original>
// kernel: my_sequential_forward.1
$region0: #{my_sequential_forward.1}
  #allocation0 [shape = 'u32[]', space=smem, size = 0x4, offset = 0x4, fixed_abs, tag = 'smem constant byte address 0x4 - core index']
  #allocation1 [shape = 'u32[144,128]{1,0:T(1,128)}', space=vmem, size = 0x12000, scoped, tag = 'internal scratch']
  %s0 = inlined_call_operand.vmem [shape: f32[8,21], index: 0, kind: input, shape index: {}]
  %s1 = inlined_call_operand.vmem [shape: f32[21,256], index: 1, kind: input, shape index: {}]
  %s2 = inlined_call_operand.vmem [shape: f32[128,256], index: 2, kind: input, shape index: {}]
  %s3 = inlined_call_operand.vmem [shape: f32[1,128], index: 3, kind: input, shape index: {}]
  %s4 = inlined_call_operand.vmem [shape: f32[8,128], index: 4, kind: output, shape index: {}]
  %s5 = sld [smem:[#allocation0]]
  $region26: #{my_sequential_forward.1} parent=0
    _
  %s7 = ssub.s32 1, %s5
  %s8 = scalar_select 0, %s7, %s5
  // Predicated region
  $region2: #{my_sequential_forward.1} parent=0 // pred_check
    _
  $region3: #{my_sequential_forward.1} parent=0 // pred_check_branch
    %10 = sbr.rel (0) target = $region5
  $region4: #{my_sequential_forward.1} parent=0 // pred_region
    _
  $region5: #{my_sequential_forward.1} parent=0 // pred_fallthru
    _
  // Predicated region
  $region6: #{my_sequential_forward.1} parent=0 // pred_check
    _
  $region7: #{my_sequential_forward.1} parent=0 // pred_check_branch
    %12 = sbr.rel (0) target = $region9
  $region8: #{my_sequential_forward.1} parent=0 // pred_region
    _
  $region9: #{my_sequential_forward.1} parent=0 // pred_fallthru
    _
  // Predicated region
  $region10: #{my_sequential_forward.1} parent=0 // pred_check
    _
  $region11: #{my_sequential_forward.1} parent=0 // pred_check_branch
    %14 = sbr.rel (0) target = $region13
  $region12: #{my_sequential_forward.1} parent=0 // pred_region
    _
  $region13: #{my_sequential_forward.1} parent=0 // pred_fallthru
    _
  // Predicated region
  $region14: #{my_sequential_forward.1} parent=0 // pred_check
    _
  $region15: #{my_sequential_forward.1} parent=0 // pred_check_branch
    %16 = sbr.rel (0) target = $region17
  $region16: #{my_sequential_forward.1} parent=0 // pred_region
    _
  $region17: #{my_sequential_forward.1} parent=0 // pred_fallthru
    _
  %v17 = vld [vmem:[%s0] sm:$0xff]
  %v18 = vld [vmem:[%s1] sm:$0xff]
  %v19 = vld [vmem:[%s1 + $0x8] sm:$0xff]
  %v20 = vld [vmem:[%s1 + $0x10] sm:$0xff]
  %v21 = vld [vmem:[%s1 + $0x18] sm:$0xff]
  %v22 = vld [vmem:[%s1 + $0x20] sm:$0x1f]
  %v23 = vld [vmem:[%s1 + $0x28] sm:$0x1f]
  %vm24 = vcmask 171008
  %v26 = vsel %vm24, %v17, 0
  %vm28 = vcmask 1044480
  %v30 = vsel %vm28, %v22, 0
  %v33 = vsel %vm28, %v23, 0
  %35 = vmatprep.subr.mxu0 %v19
  %36 = vmatpush1.msra.mxu0 %v18
  %37 = vmatprep.subr.mxu0 %v21
  %38 = vmatpush1.msra.mxu0 %v20
  %39 = vmatprep.subr.mxu0 %v33
  %40 = vmatpush1.msra.mxu0 %v30
  %41 = vmatprep.subr.mxu0 0.0
  %42 = vmatpush1.msra.mxu0 0.0
  %43 = vmatprep.subr.mxu0 0.0
  %44 = vmatpush1.msra.mxu0 0.0
  %45 = vmatprep.subr.mxu0 0.0
  %46 = vmatpush1.msra.mxu0 0.0
  %47 = vmatprep.subr.mxu0 0.0
  %48 = vmatpush1.msra.mxu0 0.0
  %49 = vmatprep.subr.mxu0 0.0
  %50 = vmatpush1.msra.mxu0 0.0
  %51 = vmatprep.subr.mxu0 0.0
  %52 = vmatpush1.msra.mxu0 0.0
  %53 = vmatprep.subr.mxu0 0.0
  %54 = vmatpush1.msra.mxu0 0.0
  %55 = vmatprep.subr.mxu0 0.0
  %56 = vmatpush1.msra.mxu0 0.0
  %57 = vmatprep.subr.mxu0 0.0
  %58 = vmatpush1.msra.mxu0 0.0
  %59 = vmatprep.subr.mxu0 0.0
  %60 = vmatpush1.msra.mxu0 0.0
  %61 = vmatprep.subr.mxu0 0.0
  %62 = vmatpush1.msra.mxu0 0.0
  %63 = vmatprep.subr.mxu0 0.0
  %64 = vmatpush1.msra.mxu0 0.0
  %65 = vmatprep.subr.mxu0 0.0
  %66 = vmatpush1.msra.mxu0 0.0
  %67 = vmatprep.subr.mxu0 0.0
  %68 = vmatpush1.msra.mxu0 0.0
  %69 = vmatprep.subr.mxu0 0.0
  %70 = vmatpush1.msra.mxu0 0.0
  %71 = vmatprep.subr.mxu0 0.0
  %72 = vmatpush1.msra.mxu0 0.0
  %73 = vmatprep.subr.mxu0 0.0
  %74 = vmatpush1.msra.mxu0 0.0
  %75 = vmatprep.subr.mxu0 0.0
  %76 = vmatpush1.msra.mxu0 0.0
  %77 = vmatprep.subr.mxu0 0.0
  %78 = vmatpush1.msra.mxu0 0.0
  %79 = vmatprep.subr.mxu0 0.0
  %80 = vmatpush1.msra.mxu0 0.0
  %81 = vmatprep.subr.mxu0 0.0
  %82 = vmatpush1.msra.mxu0 0.0
  %83 = vmatprep.subr.mxu0 0.0
  %84 = vmatpush1.msra.mxu0 0.0
  %85 = vmatprep.subr.mxu0 0.0
  %86 = vmatpush1.msra.mxu0 0.0
  %87 = vmatprep.subr.mxu0 0.0
  %88 = vmatpush1.msra.mxu0 0.0
  %89 = vmatprep.subr.mxu0 0.0
  %90 = vmatpush1.msra.mxu0 0.0
  %91 = vmatprep.subr.mxu0 0.0
  %92 = vmatpush1.msra.mxu0 0.0
  %93 = vmatprep.subr.mxu0 0.0
  %94 = vmatpush1.msra.mxu0 0.0
  %95 = vmatprep.subr.mxu0 0.0
  %96 = vmatpush1.msra.mxu0 0.0
  %97 = vmatprep.subr.mxu0 0.0
  %98 = vmatpush1.msra.mxu0 0.0
  %99 = vmatprep.mubr.f32.mxu0 0.0
  %100 = vmatmul.mubr.f32.gmra.mrb[0].mxu0 %v26
  %v101 = vpop.f32.mrb[0].mxu0
  %v102 = vadd.f32 0.0, %v101
  %v103 = vpop.f32.mrb[0].mxu0
  %v104 = vadd.f32 0.0, %v103
  %105 = vdwg.mxu0
  %v106 = vmax.f32 %v102, 0.0
  %v107 = vmax.f32 %v104, 0.0
  %v108 = vld [vmem:[%s2] sm:$0xff]
  %v109 = vld [vmem:[%s2 + $0x8] sm:$0xff]
  %v110 = vld [vmem:[%s2 + $0x10] sm:$0xff]
  %v111 = vld [vmem:[%s2 + $0x18] sm:$0xff]
  %v112 = vld [vmem:[%s2 + $0x20] sm:$0xff]
  %v113 = vld [vmem:[%s2 + $0x28] sm:$0xff]
  %v114 = vld [vmem:[%s2 + $0x30] sm:$0xff]
  %v115 = vld [vmem:[%s2 + $0x38] sm:$0xff]
  %v116 = vld [vmem:[%s2 + $0x40] sm:$0xff]
  %v117 = vld [vmem:[%s2 + $0x48] sm:$0xff]
  %v118 = vld [vmem:[%s2 + $0x50] sm:$0xff]
  %v119 = vld [vmem:[%s2 + $0x58] sm:$0xff]
  %v120 = vld [vmem:[%s2 + $0x60] sm:$0xff]
  %v121 = vld [vmem:[%s2 + $0x68] sm:$0xff]
  %v122 = vld [vmem:[%s2 + $0x70] sm:$0xff]
  %v123 = vld [vmem:[%s2 + $0x78] sm:$0xff]
  %v124 = vld [vmem:[%s2 + $0x80] sm:$0xff]
  %v125 = vld [vmem:[%s2 + $0x88] sm:$0xff]
  %v126 = vld [vmem:[%s2 + $0x90] sm:$0xff]
  %v127 = vld [vmem:[%s2 + $0x98] sm:$0xff]
  %v128 = vld [vmem:[%s2 + $0xa0] sm:$0xff]
  %v129 = vld [vmem:[%s2 + $0xa8] sm:$0xff]
  %v130 = vld [vmem:[%s2 + $0xb0] sm:$0xff]
  %v131 = vld [vmem:[%s2 + $0xb8] sm:$0xff]
  %v132 = vld [vmem:[%s2 + $0xc0] sm:$0xff]
  %v133 = vld [vmem:[%s2 + $0xc8] sm:$0xff]
  %v134 = vld [vmem:[%s2 + $0xd0] sm:$0xff]
  %v135 = vld [vmem:[%s2 + $0xd8] sm:$0xff]
  %v136 = vld [vmem:[%s2 + $0xe0] sm:$0xff]
  %v137 = vld [vmem:[%s2 + $0xe8] sm:$0xff]
  %v138 = vld [vmem:[%s2 + $0xf0] sm:$0xff]
  %v139 = vld [vmem:[%s2 + $0xf8] sm:$0xff]
  %v140 = vld [vmem:[%s3] sm:$0x1]
  %v142 = vlaneseq
  %v143 = vshrl.u32 %v142, 7
  %v144 = vsub.s32 0, %v143
  %v145 = vrot.slane %v140, %v144
  %147 = vmatprep.subr.mxu0 %v109
  %148 = vmatpush1.xpose.msra.mxu0 %v108
  %149 = vmatprep.subr.mxu0 %v111
  %150 = vmatpush1.xpose.msra.mxu0 %v110
  %151 = vmatprep.subr.mxu0 %v113
  %152 = vmatpush1.xpose.msra.mxu0 %v112
  %153 = vmatprep.subr.mxu0 %v115
  %154 = vmatpush1.xpose.msra.mxu0 %v114
  %155 = vmatprep.subr.mxu0 %v117
  %156 = vmatpush1.xpose.msra.mxu0 %v116
  %157 = vmatprep.subr.mxu0 %v119
  %158 = vmatpush1.xpose.msra.mxu0 %v118
  %159 = vmatprep.subr.mxu0 %v121
  %160 = vmatpush1.xpose.msra.mxu0 %v120
  %161 = vmatprep.subr.mxu0 %v123
  %162 = vmatpush1.xpose.msra.mxu0 %v122
  %163 = vmatprep.subr.mxu0 %v125
  %164 = vmatpush1.xpose.msra.mxu0 %v124
  %165 = vmatprep.subr.mxu0 %v127
  %166 = vmatpush1.xpose.msra.mxu0 %v126
  %167 = vmatprep.subr.mxu0 %v129
  %168 = vmatpush1.xpose.msra.mxu0 %v128
  %169 = vmatprep.subr.mxu0 %v131
  %170 = vmatpush1.xpose.msra.mxu0 %v130
  %171 = vmatprep.subr.mxu0 %v133
  %172 = vmatpush1.xpose.msra.mxu0 %v132
  %173 = vmatprep.subr.mxu0 %v135
  %174 = vmatpush1.xpose.msra.mxu0 %v134
  %175 = vmatprep.subr.mxu0 %v137
  %176 = vmatpush1.xpose.msra.mxu0 %v136
  %177 = vmatprep.subr.mxu0 %v139
  %178 = vmatpush1.xpose.msra.mxu0 %v138
  %179 = vmatprep.subr.mxu0 0.0
  %180 = vmatpush1.xpose.msra.mxu0 0.0
  %181 = vmatprep.subr.mxu0 0.0
  %182 = vmatpush1.xpose.msra.mxu0 0.0
  %183 = vmatprep.subr.mxu0 0.0
  %184 = vmatpush1.xpose.msra.mxu0 0.0
  %185 = vmatprep.subr.mxu0 0.0
  %186 = vmatpush1.xpose.msra.mxu0 0.0
  %187 = vmatprep.subr.mxu0 0.0
  %188 = vmatpush1.xpose.msra.mxu0 0.0
  %189 = vmatprep.subr.mxu0 0.0
  %190 = vmatpush1.xpose.msra.mxu0 0.0
  %191 = vmatprep.subr.mxu0 0.0
  %192 = vmatpush1.xpose.msra.mxu0 0.0
  %193 = vmatprep.subr.mxu0 0.0
  %194 = vmatpush1.xpose.msra.mxu0 0.0
  %195 = vmatprep.subr.mxu0 0.0
  %196 = vmatpush1.xpose.msra.mxu0 0.0
  %197 = vmatprep.subr.mxu0 0.0
  %198 = vmatpush1.xpose.msra.mxu0 0.0
  %199 = vmatprep.subr.mxu0 0.0
  %200 = vmatpush1.xpose.msra.mxu0 0.0
  %201 = vmatprep.subr.mxu0 0.0
  %202 = vmatpush1.xpose.msra.mxu0 0.0
  %203 = vmatprep.subr.mxu0 0.0
  %204 = vmatpush1.xpose.msra.mxu0 0.0
  %205 = vmatprep.subr.mxu0 0.0
  %206 = vmatpush1.xpose.msra.mxu0 0.0
  %207 = vmatprep.subr.mxu0 0.0
  %208 = vmatpush1.xpose.msra.mxu0 0.0
  %209 = vmatprep.subr.mxu0 0.0
  %210 = vmatpush1.xpose.msra.mxu0 0.0
  %211 = vmatprep.mubr.f32.mxu0 %v107
  %212 = vmatmul.mubr.f32.gmra.mrb[0].mxu0 %v106
  %v213 = vpop.f32.mrb[0].mxu0
  %v214 = vadd.f32 %v145, %v213
  %v215 = vpop.f32.mrb[0].mxu0
  %216 = vdwg.mxu0
  %217 = vst [vmem:[%s4] sm:$0xff] %v214
  // Predicated region
  $region18: #{my_sequential_forward.1} parent=0 // pred_check
    _
  $region19: #{my_sequential_forward.1} parent=0 // pred_check_branch
    %219 = sbr.rel (0) target = $region21
  $region20: #{my_sequential_forward.1} parent=0 // pred_region
    _
  $region21: #{my_sequential_forward.1} parent=0 // pred_fallthru
    _
  // Predicated region
  $region22: #{my_sequential_forward.1} parent=0 // pred_check
    _
  $region23: #{my_sequential_forward.1} parent=0 // pred_check_branch
    %221 = sbr.rel (0) target = $region25
  $region24: #{my_sequential_forward.1} parent=0 // pred_region
    _
  $region25: #{my_sequential_forward.1} parent=0 // pred_fallthru
    _

</llo_original>
